<compile_context>
chip_gen: v7x
topology: tpu7x:2x2x1
jax: 0.10.0
libtpu: 0.0.40
codegen_flags: <defaults>
</compile_context>

<pallas_src>
import functools

import jax
import jax.numpy as jnp
from jax.experimental import pallas as pl
from jax.experimental.pallas import tpu as pltpu


def _round_up(a: int, b: int) -> int:
    return (a + b - 1) // b * b


def _adapter_bn_kernel(x_ref, wd_ref, bd_ref, wu_ref, bu_ref, s_ref,
                       o_ref, sum_ref, sq_ref,
                       *, tile_n: int, n_valid: int, eps: float):
    # b_up is a per-feature constant: BatchNorm's mean subtraction (gamma=1,
    # beta=0) cancels it exactly, so it is skipped on this path.
    del bu_ref
    phase = pl.program_id(0)   # 0: accumulate batch stats, 1: normalize + store
    tile = pl.program_id(1)    # row-tile index

    # Recompute y in both phases; the matmuls are tiny (K = hidden / bottleneck),
    # which avoids a full [N, H] HBM round-trip for the intermediate.
    h = jnp.dot(x_ref[...], wd_ref[...], preferred_element_type=jnp.float32)
    h = jnp.maximum(h + bd_ref[...], 0.0)
    y = jnp.dot(h, wu_ref[...], preferred_element_type=jnp.float32)

    @pl.when(phase == 0)
    def _stats():
        @pl.when(tile == 0)
        def _init():
            sum_ref[...] = jnp.zeros_like(sum_ref)
            sq_ref[...] = jnp.zeros_like(sq_ref)

        # Mask rows that are padding (global row index >= true N).
        row = tile * tile_n + jax.lax.broadcasted_iota(jnp.int32, (tile_n, 1), 0)
        ym = jnp.where(row < n_valid, y, 0.0)
        sum_ref[...] += jnp.sum(ym, axis=0, keepdims=True)
        sq_ref[...] += jnp.sum(ym * ym, axis=0, keepdims=True)

    @pl.when(phase == 1)
    def _normalize():
        @pl.when(tile == 0)
        def _finalize():
            inv_n = 1.0 / float(n_valid)
            mean = sum_ref[...] * inv_n
            var = jnp.maximum(sq_ref[...] * inv_n - mean * mean, 0.0)
            # Fold the learnable scalar into the [1, H] inverse-std.
            sum_ref[...] = mean
            sq_ref[...] = s_ref[0, 0] * jax.lax.rsqrt(var + eps)

        o_ref[...] = (y - sum_ref[...]) * sq_ref[...]


def _adapter_kernel(x_ref, wd_ref, bd_ref, wu_ref, bu_ref, s_ref, o_ref):
    # N == 1 path: no BatchNorm (static-shape condition in the reference).
    h = jnp.dot(x_ref[...], wd_ref[...], preferred_element_type=jnp.float32)
    h = jnp.maximum(h + bd_ref[...], 0.0)
    y = jnp.dot(h, wu_ref[...], preferred_element_type=jnp.float32) + bu_ref[...]
    o_ref[...] = s_ref[0, 0] * y


def adapter_gnn_forward(x, w_down_t, b_down, w_up_t, b_up, scalar,
                        *, eps=1e-5, tile_n=None):
    """x: [num_nodes, hidden] f32.  Weights pre-transposed: w_down_t [H, B],
    w_up_t [B, H]; b_down [1, B], b_up [1, H], scalar [1, 1].  Returns [N, H] f32."""
    n, hidden = x.shape
    bneck = w_down_t.shape[1]
    apply_bn = n > 1  # static-shape condition, mirrors `if x.size(0) > 1`

    # Row-tile size: multiple of 8 (sublane), capped so double-buffered x / out
    # tiles stay a few hundred KiB even on v7x (64 MiB physical VMEM).
    if tile_n is None:
        tile_n = min(1024, _round_up(n, 8))
    tile_n = _round_up(tile_n, 8)
    n_pad = _round_up(n, tile_n)
    if n_pad != n:
        x = jnp.pad(x, ((0, n_pad - n), (0, 0)))
    num_tiles = n_pad // tile_n

    io_bytes = n_pad * hidden * 4
    weight_bytes = 4 * (w_down_t.size + w_up_t.size + b_down.size + b_up.size)

    if apply_bn:
        kernel = functools.partial(_adapter_bn_kernel,
                                   tile_n=tile_n, n_valid=n, eps=eps)
        out = pl.pallas_call(
            kernel,
            out_shape=jax.ShapeDtypeStruct((n_pad, hidden), jnp.float32),
            grid=(2, num_tiles),  # (phase, row tile)
            in_specs=[
                pl.BlockSpec((tile_n, hidden), lambda p, i: (i, 0)),   # x
                pl.BlockSpec((hidden, bneck), lambda p, i: (0, 0)),    # W_down^T (resident)
                pl.BlockSpec((1, bneck), lambda p, i: (0, 0)),         # b_down   (resident)
                pl.BlockSpec((bneck, hidden), lambda p, i: (0, 0)),    # W_up^T   (resident)
                pl.BlockSpec((1, hidden), lambda p, i: (0, 0)),        # b_up     (unused here)
                pl.BlockSpec(memory_space=pltpu.SMEM),                 # scalar   [1, 1]
            ],
            # Phase 0 never writes; pin its output window to block 0 so only
            # phase 1 produces HBM writebacks (exactly one write of out).
            out_specs=pl.BlockSpec((tile_n, hidden), lambda p, i: (i * p, 0)),
            scratch_shapes=[pltpu.VMEM((1, hidden), jnp.float32),   # sum   -> mean
                            pltpu.VMEM((1, hidden), jnp.float32)],  # sumsq -> s*inv_std
            compiler_params=pltpu.CompilerParams(
                dimension_semantics=("arbitrary", "arbitrary"),
                vmem_limit_bytes=32 * 1024 * 1024),
            cost_estimate=pl.CostEstimate(
                flops=8 * n_pad * hidden * bneck + 6 * n_pad * hidden,
                transcendentals=hidden,
                bytes_accessed=3 * io_bytes + weight_bytes),
        )(x, w_down_t, b_down, w_up_t, b_up, scalar)
    else:
        out = pl.pallas_call(
            _adapter_kernel,
            out_shape=jax.ShapeDtypeStruct((n_pad, hidden), jnp.float32),
            grid=(num_tiles,),
            in_specs=[
                pl.BlockSpec((tile_n, hidden), lambda i: (i, 0)),      # x
                pl.BlockSpec((hidden, bneck), lambda i: (0, 0)),       # W_down^T
                pl.BlockSpec((1, bneck), lambda i: (0, 0)),            # b_down
                pl.BlockSpec((bneck, hidden), lambda i: (0, 0)),       # W_up^T
                pl.BlockSpec((1, hidden), lambda i: (0, 0)),           # b_up
                pl.BlockSpec(memory_space=pltpu.SMEM),                 # scalar
            ],
            out_specs=pl.BlockSpec((tile_n, hidden), lambda i: (i, 0)),
            compiler_params=pltpu.CompilerParams(
                dimension_semantics=("parallel",),
                vmem_limit_bytes=32 * 1024 * 1024),
            cost_estimate=pl.CostEstimate(
                flops=4 * n_pad * hidden * bneck + 3 * n_pad * hidden,
                transcendentals=0,
                bytes_accessed=2 * io_bytes + weight_bytes),
        )(x, w_down_t, b_down, w_up_t, b_up, scalar)

    return out[:n] if n_pad != n else out


def adapter_gnn_reference(x, w_down_t, b_down, w_up_t, b_up, scalar, *, eps=1e-5):
    h = jnp.maximum(x @ w_down_t + b_down, 0.0)
    y = h @ w_up_t + b_up
    if x.shape[0] > 1:
        mean = jnp.mean(y, axis=0, keepdims=True)
        var = jnp.mean((y - mean) ** 2, axis=0, keepdims=True)
        y = (y - mean) / jnp.sqrt(var + eps)
    return scalar[0, 0] * y


if __name__ == "__main__":
    hidden_size = 32
    bottleneck_size = 8
    num_nodes = 8
    num_edges = 12

    key = jax.random.PRNGKey(0)
    k_x, k_wd, k_wu, k_ei, k_ea = jax.random.split(key, 5)

    # input node features [num_nodes, hidden_size]
    x = jax.random.normal(k_x, (num_nodes, hidden_size), dtype=jnp.float32)
    # edge_index / edge_attr: unused by the forward pass (kept for signature parity)
    edge_index = jax.random.randint(k_ei, (2, num_edges), 0, num_nodes)
    edge_attr = jax.random.normal(k_ea, (num_edges, 4), dtype=jnp.float32)

    # deterministic parameter init matching nn.Module __init__:
    #   down.weight ~ N(0, 0.01), down.bias = 0, up.weight ~ N(0, 0.01), up.bias = 0
    #   batch_norm: gamma=1, beta=0 (identity affine); scalar = 1.0
    w_down = 0.01 * jax.random.normal(k_wd, (bottleneck_size, hidden_size), jnp.float32)
    b_down = jnp.zeros((1, bottleneck_size), jnp.float32)
    w_up = 0.01 * jax.random.normal(k_wu, (hidden_size, bottleneck_size), jnp.float32)
    b_up = jnp.zeros((1, hidden_size), jnp.float32)
    scalar = jnp.ones((1, 1), jnp.float32)

    # pre-transpose weights so the kernel does row-major matmuls
    w_down_t = w_down.T  # [hidden, bottleneck]
    w_up_t = w_up.T      # [bottleneck, hidden]

    # --- BatchNorm path (N > 1), single tile ---
    out = jax.block_until_ready(
        adapter_gnn_forward(x, w_down_t, b_down, w_up_t, b_up, scalar))
    ref = adapter_gnn_reference(x, w_down_t, b_down, w_up_t, b_up, scalar)
    assert out.shape == (num_nodes, hidden_size)
    assert jnp.allclose(out, ref, atol=5e-5, rtol=1e-4)

    # --- BatchNorm path, multi-tile with row padding and non-zero biases ---
    kb1, kb2 = jax.random.split(jax.random.PRNGKey(2))
    b_down_nz = 0.05 * jax.random.normal(kb1, (1, bottleneck_size), jnp.float32)
    b_up_nz = 0.05 * jax.random.normal(kb2, (1, hidden_size), jnp.float32)
    x20 = jax.random.normal(jax.random.PRNGKey(1), (20, hidden_size), jnp.float32)
    out20 = jax.block_until_ready(
        adapter_gnn_forward(x20, w_down_t, b_down_nz, w_up_t, b_up_nz, scalar,
                            tile_n=8))
    ref20 = adapter_gnn_reference(x20, w_down_t, b_down_nz, w_up_t, b_up_nz, scalar)
    assert jnp.allclose(out20, ref20, atol=5e-5, rtol=1e-4)

    # --- N == 1 path (no BatchNorm) ---
    x1 = x[:1]
    out1 = jax.block_until_ready(
        adapter_gnn_forward(x1, w_down_t, b_down_nz, w_up_t, b_up_nz, scalar))
    ref1 = adapter_gnn_reference(x1, w_down_t, b_down_nz, w_up_t, b_up_nz, scalar)
    assert jnp.allclose(out1, ref1, atol=5e-5, rtol=1e-4)

    print("KERNEL_OK")
</pallas_src>

<mosaic_0001>
module attributes {stable_mosaic.version = 11 : i64} {
  func.func @_adapter_bn_kernel(%arg0: i32, %arg1: i32, %arg2: memref<8x32xf32, #tpu.memory_space<vmem>>, %arg3: memref<32x8xf32, #tpu.memory_space<vmem>>, %arg4: memref<1x8xf32, #tpu.memory_space<vmem>>, %arg5: memref<8x32xf32, #tpu.memory_space<vmem>>, %arg6: memref<1x32xf32, #tpu.memory_space<vmem>>, %arg7: memref<1x1xf32, #tpu.memory_space<smem>>, %arg8: memref<8x32xf32, #tpu.memory_space<vmem>>, %arg9: memref<1x32xf32, #tpu.memory_space<vmem>>, %arg10: memref<1x32xf32, #tpu.memory_space<vmem>>) attributes {dimension_semantics = [#tpu.dimension_semantics<arbitrary>, #tpu.dimension_semantics<arbitrary>], iteration_bounds = array<i64: 2, 1>, scalar_prefetch = 0 : i64, scratch_operands = 2 : i64, tpu.core_type = #tpu.core_type<tc>, window_params = [{transform_indices = @transform_0, window_bounds = array<i64: 8, 32>}, {pipeline_mode = #tpu.pipeline_mode<synchronous>, transform_indices = @transform_1, window_bounds = array<i64: 32, 8>}, {pipeline_mode = #tpu.pipeline_mode<synchronous>, transform_indices = @transform_2, window_bounds = array<i64: 1, 8>}, {pipeline_mode = #tpu.pipeline_mode<synchronous>, transform_indices = @transform_3, window_bounds = array<i64: 8, 32>}, {pipeline_mode = #tpu.pipeline_mode<synchronous>, transform_indices = @transform_4, window_bounds = array<i64: 1, 32>}, {transform_indices = @transform_5, window_bounds = array<i64: 1, 1>}, {transform_indices = @transform_6, window_bounds = array<i64: 8, 32>}]} {
    %c0 = arith.constant 0 : index
    %c0_0 = arith.constant 0 : index
    %0 = vector.load %arg2[%c0, %c0_0] : memref<8x32xf32, #tpu.memory_space<vmem>>, vector<8x32xf32>
    %c0_1 = arith.constant 0 : index
    %c0_2 = arith.constant 0 : index
    %1 = vector.load %arg3[%c0_1, %c0_2] : memref<32x8xf32, #tpu.memory_space<vmem>>, vector<32x8xf32>
    %cst = arith.constant dense<0.000000e+00> : vector<8x8xf32>
    %2 = tpu.matmul %0, %1, %cst {dimension_numbers = #tpu.dot_dimension_numbers<[1], [0], [0], [1], [0, 0, 1, 1], [], []>} : vector<8x32xf32>, vector<32x8xf32>, vector<8x8xf32> -> vector<8x8xf32>
    %c0_3 = arith.constant 0 : index
    %c0_4 = arith.constant 0 : index
    %3 = vector.load %arg4[%c0_3, %c0_4] : memref<1x8xf32, #tpu.memory_space<vmem>>, vector<1x8xf32>
    %4 = vector.broadcast %3 : vector<1x8xf32> to vector<8x8xf32>
    %5 = arith.addf %2, %4 : vector<8x8xf32>
    %cst_5 = arith.constant 0.000000e+00 : f32
    %6 = vector.broadcast %cst_5 : f32 to vector<8x8xf32>
    %7 = arith.maximumf %5, %6 : vector<8x8xf32>
    %c0_6 = arith.constant 0 : index
    %c0_7 = arith.constant 0 : index
    %8 = vector.load %arg5[%c0_6, %c0_7] : memref<8x32xf32, #tpu.memory_space<vmem>>, vector<8x32xf32>
    %cst_8 = arith.constant dense<0.000000e+00> : vector<8x32xf32>
    %9 = tpu.matmul %7, %8, %cst_8 {dimension_numbers = #tpu.dot_dimension_numbers<[1], [0], [0], [1], [0, 0, 1, 1], [], []>} : vector<8x8xf32>, vector<8x32xf32>, vector<8x32xf32> -> vector<8x32xf32>
    %c0_i32 = arith.constant 0 : i32
    %10 = arith.cmpi eq, %arg0, %c0_i32 : i32
    %11 = arith.extui %10 : i1 to i32
    %c0_i32_9 = arith.constant 0 : i32
    %12 = arith.cmpi ne, %11, %c0_i32_9 : i32
    scf.if %12 {
      %c0_i32_11 = arith.constant 0 : i32
      %16 = arith.cmpi eq, %arg1, %c0_i32_11 : i32
      %17 = arith.extui %16 : i1 to i32
      %c0_i32_12 = arith.constant 0 : i32
      %18 = arith.cmpi ne, %17, %c0_i32_12 : i32
      scf.if %18 {
        %cst_25 = arith.constant 0.000000e+00 : f32
        %40 = vector.broadcast %cst_25 : f32 to vector<1x32xf32>
        %c0_26 = arith.constant 0 : index
        %c0_27 = arith.constant 0 : index
        %41 = vector.load %arg9[%c0_26, %c0_27] : memref<1x32xf32, #tpu.memory_space<vmem>>, vector<1x32xf32>
        tpu.vector_store %arg9[%c0_26, %c0_27], %40 {strides = array<i32>} : memref<1x32xf32, #tpu.memory_space<vmem>>, vector<1x32xf32>,
        %cst_28 = arith.constant 0.000000e+00 : f32
        %42 = vector.broadcast %cst_28 : f32 to vector<1x32xf32>
        %c0_29 = arith.constant 0 : index
        %c0_30 = arith.constant 0 : index
        %43 = vector.load %arg10[%c0_29, %c0_30] : memref<1x32xf32, #tpu.memory_space<vmem>>, vector<1x32xf32>
        tpu.vector_store %arg10[%c0_29, %c0_30], %42 {strides = array<i32>} : memref<1x32xf32, #tpu.memory_space<vmem>>, vector<1x32xf32>,
      } else {
      }
      %c8_i32 = arith.constant 8 : i32
      %19 = arith.muli %arg1, %c8_i32 : i32
      %20 = tpu.iota {dimensions = array<i32: 0>} : vector<8x1xi32>
      %21 = vector.broadcast %19 : i32 to vector<8x1xi32>
      %22 = arith.addi %21, %20 : vector<8x1xi32>
      %c8_i32_13 = arith.constant 8 : i32
      %23 = vector.broadcast %c8_i32_13 : i32 to vector<8x1xi32>
      %24 = arith.cmpi slt, %22, %23 : vector<8x1xi32>
      %cst_14 = arith.constant 0.000000e+00 : f32
      %25 = vector.shape_cast %24 : vector<8x1xi1> to vector<8x1xi1>
      %26 = vector.broadcast %25 : vector<8x1xi1> to vector<8x32xi1>
      %27 = vector.broadcast %cst_14 : f32 to vector<8x32xf32>
      %28 = arith.select %26, %9, %27 : vector<8x32xi1>, vector<8x32xf32>
      %c0_15 = arith.constant 0 : index
      %c0_16 = arith.constant 0 : index
      %29 = vector.load %arg9[%c0_15, %c0_16] : memref<1x32xf32, #tpu.memory_space<vmem>>, vector<1x32xf32>
      %cst_17 = arith.constant dense<0.000000e+00> : vector<32xf32>
      %30 = vector.multi_reduction <add>, %28, %cst_17 [0] : vector<8x32xf32> to vector<32xf32>
      %31 = vector.shape_cast %30 : vector<32xf32> to vector<1x32xf32>
      %32 = arith.addf %29, %31 : vector<1x32xf32>
      %c0_18 = arith.constant 0 : index
      %c0_19 = arith.constant 0 : index
      %33 = vector.load %arg9[%c0_18, %c0_19] : memref<1x32xf32, #tpu.memory_space<vmem>>, vector<1x32xf32>
      tpu.vector_store %arg9[%c0_18, %c0_19], %32 {strides = array<i32>} : memref<1x32xf32, #tpu.memory_space<vmem>>, vector<1x32xf32>,
      %c0_20 = arith.constant 0 : index
      %c0_21 = arith.constant 0 : index
      %34 = vector.load %arg10[%c0_20, %c0_21] : memref<1x32xf32, #tpu.memory_space<vmem>>, vector<1x32xf32>
      %35 = arith.mulf %28, %28 : vector<8x32xf32>
      %cst_22 = arith.constant dense<0.000000e+00> : vector<32xf32>
      %36 = vector.multi_reduction <add>, %35, %cst_22 [0] : vector<8x32xf32> to vector<32xf32>
      %37 = vector.shape_cast %36 : vector<32xf32> to vector<1x32xf32>
      %38 = arith.addf %34, %37 : vector<1x32xf32>
      %c0_23 = arith.constant 0 : index
      %c0_24 = arith.constant 0 : index
      %39 = vector.load %arg10[%c0_23, %c0_24] : memref<1x32xf32, #tpu.memory_space<vmem>>, vector<1x32xf32>
      tpu.vector_store %arg10[%c0_23, %c0_24], %38 {strides = array<i32>} : memref<1x32xf32, #tpu.memory_space<vmem>>, vector<1x32xf32>,
    } else {
    }
    %c1_i32 = arith.constant 1 : i32
    %13 = arith.cmpi eq, %arg0, %c1_i32 : i32
    %14 = arith.extui %13 : i1 to i32
    %c0_i32_10 = arith.constant 0 : i32
    %15 = arith.cmpi ne, %14, %c0_i32_10 : i32
    scf.if %15 {
      %c0_i32_11 = arith.constant 0 : i32
      %16 = arith.cmpi eq, %arg1, %c0_i32_11 : i32
      %17 = arith.extui %16 : i1 to i32
      %c0_i32_12 = arith.constant 0 : i32
      %18 = arith.cmpi ne, %17, %c0_i32_12 : i32
      scf.if %18 {
        %c0_19 = arith.constant 0 : index
        %c0_20 = arith.constant 0 : index
        %26 = vector.load %arg9[%c0_19, %c0_20] : memref<1x32xf32, #tpu.memory_space<vmem>>, vector<1x32xf32>
        %cst_21 = arith.constant 1.250000e-01 : f32
        %27 = vector.broadcast %cst_21 : f32 to vector<1x32xf32>
        %28 = arith.mulf %26, %27 : vector<1x32xf32>
        %c0_22 = arith.constant 0 : index
        %c0_23 = arith.constant 0 : index
        %29 = vector.load %arg10[%c0_22, %c0_23] : memref<1x32xf32, #tpu.memory_space<vmem>>, vector<1x32xf32>
        %cst_24 = arith.constant 1.250000e-01 : f32
        %30 = vector.broadcast %cst_24 : f32 to vector<1x32xf32>
        %31 = arith.mulf %29, %30 : vector<1x32xf32>
        %32 = arith.mulf %28, %28 : vector<1x32xf32>
        %33 = arith.subf %31, %32 : vector<1x32xf32>
        %cst_25 = arith.constant 0.000000e+00 : f32
        %34 = vector.broadcast %cst_25 : f32 to vector<1x32xf32>
        %35 = arith.maximumf %33, %34 : vector<1x32xf32>
        %c0_26 = arith.constant 0 : index
        %c0_27 = arith.constant 0 : index
        %36 = vector.load %arg9[%c0_26, %c0_27] : memref<1x32xf32, #tpu.memory_space<vmem>>, vector<1x32xf32>
        tpu.vector_store %arg9[%c0_26, %c0_27], %28 {strides = array<i32>} : memref<1x32xf32, #tpu.memory_space<vmem>>, vector<1x32xf32>,
        %c0_28 = arith.constant 0 : index
        %c0_29 = arith.constant 0 : index
        %37 = memref.load %arg7[%c0_28, %c0_29] : memref<1x1xf32, #tpu.memory_space<smem>>
        %cst_30 = arith.constant 9.99999974E-6 : f32
        %38 = vector.broadcast %cst_30 : f32 to vector<1x32xf32>
        %39 = arith.addf %35, %38 : vector<1x32xf32>
        %40 = math.rsqrt %39 : vector<1x32xf32>
        %41 = vector.broadcast %37 : f32 to vector<1x32xf32>
        %42 = arith.mulf %41, %40 : vector<1x32xf32>
        %c0_31 = arith.constant 0 : index
        %c0_32 = arith.constant 0 : index
        %43 = vector.load %arg10[%c0_31, %c0_32] : memref<1x32xf32, #tpu.memory_space<vmem>>, vector<1x32xf32>
        tpu.vector_store %arg10[%c0_31, %c0_32], %42 {strides = array<i32>} : memref<1x32xf32, #tpu.memory_space<vmem>>, vector<1x32xf32>,
      } else {
      }
      %c0_13 = arith.constant 0 : index
      %c0_14 = arith.constant 0 : index
      %19 = vector.load %arg9[%c0_13, %c0_14] : memref<1x32xf32, #tpu.memory_space<vmem>>, vector<1x32xf32>
      %20 = vector.broadcast %19 : vector<1x32xf32> to vector<8x32xf32>
      %21 = arith.subf %9, %20 : vector<8x32xf32>
      %c0_15 = arith.constant 0 : index
      %c0_16 = arith.constant 0 : index
      %22 = vector.load %arg10[%c0_15, %c0_16] : memref<1x32xf32, #tpu.memory_space<vmem>>, vector<1x32xf32>
      %23 = vector.broadcast %22 : vector<1x32xf32> to vector<8x32xf32>
      %24 = arith.mulf %21, %23 : vector<8x32xf32>
      %c0_17 = arith.constant 0 : index
      %c0_18 = arith.constant 0 : index
      %25 = vector.load %arg8[%c0_17, %c0_18] : memref<8x32xf32, #tpu.memory_space<vmem>>, vector<8x32xf32>
      tpu.vector_store %arg8[%c0_17, %c0_18], %24 {strides = array<i32>} : memref<8x32xf32, #tpu.memory_space<vmem>>, vector<8x32xf32>,
    } else {
    }
    return
  }
  func.func @transform_0(%arg0: i32, %arg1: i32) -> (i32, i32) {
    %c0_i32 = arith.constant 0 : i32
    %c0_i32_0 = arith.constant 0 : i32
    return %arg1, %c0_i32 : i32, i32
  }
  func.func @transform_1(%arg0: i32, %arg1: i32) -> (i32, i32) {
    %c0_i32 = arith.constant 0 : i32
    %c0_i32_0 = arith.constant 0 : i32
    %c0_i32_1 = arith.constant 0 : i32
    return %c0_i32, %c0_i32_0 : i32, i32
  }
  func.func @transform_2(%arg0: i32, %arg1: i32) -> (i32, i32) {
    %c0_i32 = arith.constant 0 : i32
    %c0_i32_0 = arith.constant 0 : i32
    %c0_i32_1 = arith.constant 0 : i32
    return %c0_i32, %c0_i32_0 : i32, i32
  }
  func.func @transform_3(%arg0: i32, %arg1: i32) -> (i32, i32) {
    %c0_i32 = arith.constant 0 : i32
    %c0_i32_0 = arith.constant 0 : i32
    %c0_i32_1 = arith.constant 0 : i32
    return %c0_i32, %c0_i32_0 : i32, i32
  }
  func.func @transform_4(%arg0: i32, %arg1: i32) -> (i32, i32) {
    %c0_i32 = arith.constant 0 : i32
    %c0_i32_0 = arith.constant 0 : i32
    %c0_i32_1 = arith.constant 0 : i32
    return %c0_i32, %c0_i32_0 : i32, i32
  }
  func.func @transform_5(%arg0: i32, %arg1: i32) -> (i32, i32) {
    %c0_i32 = arith.constant 0 : i32
    %c0_i32_0 = arith.constant 0 : i32
    %c0_i32_1 = arith.constant 0 : i32
    return %c0_i32, %c0_i32_0 : i32, i32
  }
  func.func @transform_6(%arg0: i32, %arg1: i32) -> (i32, i32) {
    %0 = arith.muli %arg1, %arg0 : i32
    %c0_i32 = arith.constant 0 : i32
    %c0_i32_0 = arith.constant 0 : i32
    return %0, %c0_i32 : i32, i32
  }
}

</mosaic_0001>

<llo_original>
// kernel: tpu_custom_call.1
$region0: #{tpu_custom_call.1}
  #allocation0 [shape = 'u32[]', space=smem, size = 0x4, offset = 0x4, fixed_abs, tag = 'smem constant byte address 0x4 - core index']
  #allocation1 [shape = 'u32[144,128]{1,0:T(1,128)}', space=vmem, size = 0x12000, scoped, tag = 'internal scratch']
  #allocation2 [shape = 'f32[1,32]{1,0:T(1,128)}', space=vmem, size = 0x200, scoped, tag = 'scratch operand']
  #allocation3 [shape = 'f32[1,32]{1,0:T(1,128)}', space=vmem, size = 0x200, scoped, tag = 'scratch operand']
  #allocation4 [shape = 'f32[1,1]{1,0:T(1,128)S(6)}', space=smem, size = 0x200, scoped, tag = 'scoped memory for tpu_custom_call.1']
  %s0 = inlined_call_operand.vmem [shape: f32[8,32], index: 0, kind: input, shape index: {}]
  %s1 = inlined_call_operand.vmem [shape: f32[32,8], index: 1, kind: input, shape index: {}]
  %s2 = inlined_call_operand.vmem [shape: f32[1,8], index: 2, kind: input, shape index: {}]
  %s3 = inlined_call_operand.vmem [shape: f32[8,32], index: 3, kind: input, shape index: {}]
  %s4 = inlined_call_operand.vmem [shape: f32[1,32], index: 4, kind: input, shape index: {}]
  %s5 = inlined_call_operand.<no memory space> [shape: f32[1,1], index: 5, kind: input, shape index: {}]
  %s6 = inlined_call_operand.hbm [shape: f32[8,32], index: 6, kind: output, shape index: {}]
  %s7 = sld [smem:[#allocation0]]
  $region73: #{tpu_custom_call.1} parent=0
    _
  %s9 = ssub.s32 1, %s7
  %s10 = scalar_select 0, %s9, %s7
  %11 = sst [smem:[#allocation4]] %s5
  $region1: #{tpu_custom_call.1} parent=0
    #allocation5 [shape = 'u8[8192]{0}', space=vmem, size = 0x2000, scoped, tag = 'output window, operand 0']
    #allocation6 [shape = 's32[2]{0}', space=sflag, size = 0x8, scoped, tag = 'scoped memory for tpu_custom_call.1']
    %12 = vsyncpa [#allocation6], 0
    %s13 = scalar_lea.sflag [#allocation6], 1
    %14 = vsyncpa %s13, 0
    loop: start=0, step=1, limit=4
    $region2: #{tpu_custom_call.1} parent=1 // loop_pre_header
      _
    $region3: #{tpu_custom_call.1} parent=1 // loop_header
      %s16 = sphi 0, %s20
      %p17 = scmp.ge.s32.totalorder %s16, 4
      %s23 = sphi 0, %s35
      %s24 = sphi 0, %s31
      %s25 = sphi 0, %s23
      %s26 = sphi 0, %s24
      %s27 = sphi 0, %s25
      %s28 = sphi 0, %s26
      %s38 = sphi 0, %s40
      %s41 = sphi 0, %s38
      %s42 = sphi 0, %s41
      %s58 = sphi 0, %s42
      %s62 = sphi 0, %s62
      %s64 = sphi 0, %s62
      %s65 = sphi 0, %s64
      %s79 = sphi 0, %s65
      %s83 = sphi 0, %s83
      %s85 = sphi 0, %s83
      %s86 = sphi 0, %s85
      %s100 = sphi 0, %s86
      %s104 = sphi 0, %s104
      %s106 = sphi 0, %s104
      %s107 = sphi 0, %s106
      %s121 = sphi 0, %s107
      %s125 = sphi 0, %s125
      %s127 = sphi 0, %s125
      %s128 = sphi 0, %s127
      %s142 = sphi 0, %s128
      %s146 = sphi 0, %s146
      %s148 = sphi 0, %s146
      %s149 = sphi 0, %s148
      %s163 = sphi 0, %s149
      %s171 = sphi 0, %s173
      %s174 = sphi 0, %s171
      %s175 = sphi 0, %s174
      %s191 = sphi 0, %s175
    $region4: #{tpu_custom_call.1} parent=1 // loop_header_branch
      %19 = sbr.rel (%p17) target = $region8
    $region5: #{tpu_custom_call.1} parent=1 // loop_body
      %s21 = ssub.s32 %s16, 1
      %s22 = ssub.s32 %s16, 2
      %s29 = sadd.s32 1, %s24
      %p30 = scmp.ge.s32.totalorder %s29, 1
      %s31 = scalar_select %p30, 0, %s29
      %s32 = sadd.s32 1, %s23
      %s33 = scalar_select %p30, %s32, %s23
      %p34 = scmp.ge.s32.totalorder %s33, 2
      %s35 = scalar_select %p34, 0, %s33
      %s36 = ssub.s32 %s24, %s31
      %p37 = scmp.eq.s32.totalorder %s36, 0
      %s39 = sadd.s32 %s38, 1
      %s40 = scalar_select %p37, %s38, %s39
      %p43 = pneg %p37
      %p44 = scmp.eq.s32.totalorder %s16, 1
      %p45 = por %p43, %p44
      %p46 = scmp.ne.s32.totalorder %s38, %s41
      %p47 = scmp.eq.s32.totalorder %s16, 0
      %p48 = por %p46, %p47
      %p49 = scmp.ne.s32.totalorder %s38, %s41
      %p50 = scmp.eq.s32.totalorder %s21, 1
      %p51 = por %p49, %p50
      %p52 = scmp.ne.s32.totalorder %s41, %s42
      %p53 = scmp.eq.s32.totalorder %s21, 0
      %p54 = por %p52, %p53
      %p55 = scmp.ne.s32.totalorder %s41, %s42
      %p56 = scmp.eq.s32.totalorder %s22, 1
      %p57 = por %p55, %p56
      %p59 = scmp.ne.s32.totalorder %s42, %s58
      %p60 = scmp.eq.s32.totalorder %s22, 0
      %p61 = por %p59, %p60
      %s63 = sadd.s32 %s62, 1
      %p66 = scmp.eq.s32.totalorder %s16, 1
      %p67 = scmp.ne.s32.totalorder %s62, %s64
      %p68 = scmp.eq.s32.totalorder %s16, 0
      %p69 = por %p67, %p68
      %p70 = scmp.ne.s32.totalorder %s62, %s64
      %p71 = scmp.eq.s32.totalorder %s21, 1
      %p72 = por %p70, %p71
      %p73 = scmp.ne.s32.totalorder %s64, %s65
      %p74 = scmp.eq.s32.totalorder %s21, 0
      %p75 = por %p73, %p74
      %p76 = scmp.ne.s32.totalorder %s64, %s65
      %p77 = scmp.eq.s32.totalorder %s22, 1
      %p78 = por %p76, %p77
      %p80 = scmp.ne.s32.totalorder %s65, %s79
      %p81 = scmp.eq.s32.totalorder %s22, 0
      %p82 = por %p80, %p81
      %s84 = sadd.s32 %s83, 1
      %p87 = scmp.eq.s32.totalorder %s16, 1
      %p88 = scmp.ne.s32.totalorder %s83, %s85
      %p89 = scmp.eq.s32.totalorder %s16, 0
      %p90 = por %p88, %p89
      %p91 = scmp.ne.s32.totalorder %s83, %s85
      %p92 = scmp.eq.s32.totalorder %s21, 1
      %p93 = por %p91, %p92
      %p94 = scmp.ne.s32.totalorder %s85, %s86
      %p95 = scmp.eq.s32.totalorder %s21, 0
      %p96 = por %p94, %p95
      %p97 = scmp.ne.s32.totalorder %s85, %s86
      %p98 = scmp.eq.s32.totalorder %s22, 1
      %p99 = por %p97, %p98
      %p101 = scmp.ne.s32.totalorder %s86, %s100
      %p102 = scmp.eq.s32.totalorder %s22, 0
      %p103 = por %p101, %p102
      %s105 = sadd.s32 %s104, 1
      %p108 = scmp.eq.s32.totalorder %s16, 1
      %p109 = scmp.ne.s32.totalorder %s104, %s106
      %p110 = scmp.eq.s32.totalorder %s16, 0
      %p111 = por %p109, %p110
      %p112 = scmp.ne.s32.totalorder %s104, %s106
      %p113 = scmp.eq.s32.totalorder %s21, 1
      %p114 = por %p112, %p113
      %p115 = scmp.ne.s32.totalorder %s106, %s107
      %p116 = scmp.eq.s32.totalorder %s21, 0
      %p117 = por %p115, %p116
      %p118 = scmp.ne.s32.totalorder %s106, %s107
      %p119 = scmp.eq.s32.totalorder %s22, 1
      %p120 = por %p118, %p119
      %p122 = scmp.ne.s32.totalorder %s107, %s121
      %p123 = scmp.eq.s32.totalorder %s22, 0
      %p124 = por %p122, %p123
      %s126 = sadd.s32 %s125, 1
      %p129 = scmp.eq.s32.totalorder %s16, 1
      %p130 = scmp.ne.s32.totalorder %s125, %s127
      %p131 = scmp.eq.s32.totalorder %s16, 0
      %p132 = por %p130, %p131
      %p133 = scmp.ne.s32.totalorder %s125, %s127
      %p134 = scmp.eq.s32.totalorder %s21, 1
      %p135 = por %p133, %p134
      %p136 = scmp.ne.s32.totalorder %s127, %s128
      %p137 = scmp.eq.s32.totalorder %s21, 0
      %p138 = por %p136, %p137
      %p139 = scmp.ne.s32.totalorder %s127, %s128
      %p140 = scmp.eq.s32.totalorder %s22, 1
      %p141 = por %p139, %p140
      %p143 = scmp.ne.s32.totalorder %s128, %s142
      %p144 = scmp.eq.s32.totalorder %s22, 0
      %p145 = por %p143, %p144
      %s147 = sadd.s32 %s146, 1
      %p150 = scmp.eq.s32.totalorder %s16, 1
      %p151 = scmp.ne.s32.totalorder %s146, %s148
      %p152 = scmp.eq.s32.totalorder %s16, 0
      %p153 = por %p151, %p152
      %p154 = scmp.ne.s32.totalorder %s146, %s148
      %p155 = scmp.eq.s32.totalorder %s21, 1
      %p156 = por %p154, %p155
      %p157 = scmp.ne.s32.totalorder %s148, %s149
      %p158 = scmp.eq.s32.totalorder %s21, 0
      %p159 = por %p157, %p158
      %p160 = scmp.ne.s32.totalorder %s148, %s149
      %p161 = scmp.eq.s32.totalorder %s22, 1
      %p162 = por %p160, %p161
      %p164 = scmp.ne.s32.totalorder %s149, %s163
      %p165 = scmp.eq.s32.totalorder %s22, 0
      %p166 = por %p164, %p165
      %s167 = smul.u32 %s24, %s23
      %s168 = smul.u32 %s31, %s35
      %s169 = ssub.s32 %s167, %s168
      %p170 = scmp.eq.s32.totalorder %s169, 0
      %s172 = sadd.s32 %s171, 1
      %s173 = scalar_select %p170, %s171, %s172
      %p176 = pneg %p170
      %p177 = scmp.eq.s32.totalorder %s16, 1
      %p178 = por %p176, %p177
      %p179 = scmp.ne.s32.totalorder %s171, %s174
      %p180 = scmp.eq.s32.totalorder %s16, 0
      %p181 = por %p179, %p180
      %p182 = scmp.ne.s32.totalorder %s171, %s174
      %p183 = scmp.eq.s32.totalorder %s21, 1
      %p184 = por %p182, %p183
      %p185 = scmp.ne.s32.totalorder %s174, %s175
      %p186 = scmp.eq.s32.totalorder %s21, 0
      %p187 = por %p185, %p186
      %p188 = scmp.ne.s32.totalorder %s174, %s175
      %p189 = scmp.eq.s32.totalorder %s22, 1
      %p190 = por %p188, %p189
      %p192 = scmp.ne.s32.totalorder %s175, %s191
      %p193 = scmp.eq.s32.totalorder %s22, 0
      %p194 = por %p192, %p193
      %p195 = scmp.le.s32.totalorder 1, %s16
      %p196 = scmp.lt.s32.totalorder %s16, 3
      %p197 = pnand %p195, %p196
      %p198 = pneg %p197
      // Predicated region
      $region9: #{tpu_custom_call.1} parent=5 // pred_check
        _
      $region10: #{tpu_custom_call.1} parent=5 // pred_check_branch
        %200 = sbr.rel (%p197) target = $region12
      $region11: #{tpu_custom_call.1} parent=5 // pred_region
        %s201 = ssub.s32 %s16, 1
        // Predicated region
        $region13: #{tpu_custom_call.1} parent=11 // pred_check
          %p202 = pneg %p54
        $region14: #{tpu_custom_call.1} parent=11 // pred_check_branch
          %204 = sbr.rel (%p202) target = $region16
        $region15: #{tpu_custom_call.1} parent=11 // pred_region
          %p205 = scmp.lt.s32.totalorder %s26, 0
          %s206 = scalar_select %p205, %s26, 0
          %s207 = smul.addr %s206, 8
          %s208 = scalar_lea.vmem %s0, %s207
        $region16: #{tpu_custom_call.1} parent=11 // pred_fallthru
          _
        // Predicated region
        $region17: #{tpu_custom_call.1} parent=11 // pred_check
          %p209 = pneg %p75
        $region18: #{tpu_custom_call.1} parent=11 // pred_check_branch
          %211 = sbr.rel (%p209) target = $region20
        $region19: #{tpu_custom_call.1} parent=11 // pred_region
          _
        $region20: #{tpu_custom_call.1} parent=11 // pred_fallthru
          _
        // Predicated region
        $region21: #{tpu_custom_call.1} parent=11 // pred_check
          %p212 = pneg %p96
        $region22: #{tpu_custom_call.1} parent=11 // pred_check_branch
          %214 = sbr.rel (%p212) target = $region24
        $region23: #{tpu_custom_call.1} parent=11 // pred_region
          _
        $region24: #{tpu_custom_call.1} parent=11 // pred_fallthru
          _
        // Predicated region
        $region25: #{tpu_custom_call.1} parent=11 // pred_check
          %p215 = pneg %p117
        $region26: #{tpu_custom_call.1} parent=11 // pred_check_branch
          %217 = sbr.rel (%p215) target = $region28
        $region27: #{tpu_custom_call.1} parent=11 // pred_region
          _
        $region28: #{tpu_custom_call.1} parent=11 // pred_fallthru
          _
        // Predicated region
        $region29: #{tpu_custom_call.1} parent=11 // pred_check
          %p218 = pneg %p138
        $region30: #{tpu_custom_call.1} parent=11 // pred_check_branch
          %220 = sbr.rel (%p218) target = $region32
        $region31: #{tpu_custom_call.1} parent=11 // pred_region
          _
        $region32: #{tpu_custom_call.1} parent=11 // pred_fallthru
          _
        // Predicated region
        $region33: #{tpu_custom_call.1} parent=11 // pred_check
          %p221 = pneg %p159
        $region34: #{tpu_custom_call.1} parent=11 // pred_check_branch
          %223 = sbr.rel (%p221) target = $region36
        $region35: #{tpu_custom_call.1} parent=11 // pred_region
          _
        $region36: #{tpu_custom_call.1} parent=11 // pred_fallthru
          _
      $region12: #{tpu_custom_call.1} parent=5 // pred_fallthru
        _
      %p224 = scmp.lt.s32.totalorder %s16, 2
      // Predicated region
      $region37: #{tpu_custom_call.1} parent=5 // pred_check
        %p225 = pneg %p224
      $region38: #{tpu_custom_call.1} parent=5 // pred_check_branch
        %227 = sbr.rel (%p225) target = $region40
      $region39: #{tpu_custom_call.1} parent=5 // pred_region
        _
      $region40: #{tpu_custom_call.1} parent=5 // pred_fallthru
        _
      %p228 = scmp.le.s32.totalorder 1, %s16
      %p229 = scmp.lt.s32.totalorder %s16, 3
      %p230 = pnand %p228, %p229
      %p231 = pneg %p230
      // Predicated region
      $region41: #{tpu_custom_call.1} parent=5 // pred_check
        _
      $region42: #{tpu_custom_call.1} parent=5 // pred_check_branch
        %233 = sbr.rel (%p230) target = $region44
      $region43: #{tpu_custom_call.1} parent=5 // pred_region
        %s234 = ssub.s32 %s16, 1
        %p235 = scmp.lt.s32.totalorder %s26, 0
        %s236 = scalar_select %p235, %s26, 0
        %s237 = smul.addr %s236, 8
        %s238 = scalar_lea.vmem %s0, %s237
        %p239 = pneg %p54
        %p240 = pneg %p51
        %p241 = pneg %p75
        %p242 = pneg %p72
        %p243 = pneg %p96
        %p244 = pneg %p93
        %p245 = pneg %p117
        %p246 = pneg %p114
        %p247 = pneg %p138
        %p248 = pneg %p135
        %p249 = pneg %p159
        %p250 = pneg %p156
        %p251 = pneg %p187
        %p252 = pneg %p184
        %s253 = sand.u32 %s174, 1
        %s254 = scalar_lea.sflag [#allocation6], %s253
        %s255 = sand.u32 %s174, 1
        %s256 = smul.addr %s255, 8
        %s257 = scalar_lea.vmem [#allocation5], %s256
        %p258 = scmp.lt.s32.totalorder %s26, 0
        %s259 = scalar_select %p258, %s26, 0
        %s260 = smul.addr %s259, 8
        %s261 = scalar_lea.vmem %s0, %s260
        %s262 = smul.u32 %s26, %s25
        %v263 = vld [vmem:[%s261] sm:$0xff]
        %v264 = vld [vmem:[%s1] sm:$0xff]
        %v265 = vld [vmem:[%s1 + $0x8] sm:$0xff]
        %v266 = vld [vmem:[%s1 + $0x10] sm:$0xff]
        %v267 = vld [vmem:[%s1 + $0x18] sm:$0xff]
        %v268 = vld [vmem:[%s2] sm:$0x1]
        %v270 = vlaneseq
        %v271 = vshrl.u32 %v270, 7
        %v272 = vsub.s32 0, %v271
        %v273 = vrot.slane %v268, %v272
        %vm275 = vcmask 261120
        %v277 = vsel %vm275, %v263, 0
        %279 = vmatprep.subr.mxu0 0.0
        %280 = vmatpush1.msra.mxu0 %v264
        %281 = vmatprep.subr.mxu0 0.0
        %282 = vmatpush1.msra.mxu0 %v265
        %283 = vmatprep.subr.mxu0 0.0
        %284 = vmatpush1.msra.mxu0 %v266
        %285 = vmatprep.subr.mxu0 0.0
        %286 = vmatpush1.msra.mxu0 %v267
        %287 = vmatprep.subr.mxu0 0.0
        %288 = vmatpush1.msra.mxu0 0.0
        %289 = vmatprep.subr.mxu0 0.0
        %290 = vmatpush1.msra.mxu0 0.0
        %291 = vmatprep.subr.mxu0 0.0
        %292 = vmatpush1.msra.mxu0 0.0
        %293 = vmatprep.subr.mxu0 0.0
        %294 = vmatpush1.msra.mxu0 0.0
        %295 = vmatprep.subr.mxu0 0.0
        %296 = vmatpush1.msra.mxu0 0.0
        %297 = vmatprep.subr.mxu0 0.0
        %298 = vmatpush1.msra.mxu0 0.0
        %299 = vmatprep.subr.mxu0 0.0
        %300 = vmatpush1.msra.mxu0 0.0
        %301 = vmatprep.subr.mxu0 0.0
        %302 = vmatpush1.msra.mxu0 0.0
        %303 = vmatprep.subr.mxu0 0.0
        %304 = vmatpush1.msra.mxu0 0.0
        %305 = vmatprep.subr.mxu0 0.0
        %306 = vmatpush1.msra.mxu0 0.0
        %307 = vmatprep.subr.mxu0 0.0
        %308 = vmatpush1.msra.mxu0 0.0
        %309 = vmatprep.subr.mxu0 0.0
        %310 = vmatpush1.msra.mxu0 0.0
        %311 = vmatprep.subr.mxu0 0.0
        %312 = vmatpush1.msra.mxu0 0.0
        %313 = vmatprep.subr.mxu0 0.0
        %314 = vmatpush1.msra.mxu0 0.0
        %315 = vmatprep.subr.mxu0 0.0
        %316 = vmatpush1.msra.mxu0 0.0
        %317 = vmatprep.subr.mxu0 0.0
        %318 = vmatpush1.msra.mxu0 0.0
        %319 = vmatprep.subr.mxu0 0.0
        %320 = vmatpush1.msra.mxu0 0.0
        %321 = vmatprep.subr.mxu0 0.0
        %322 = vmatpush1.msra.mxu0 0.0
        %323 = vmatprep.subr.mxu0 0.0
        %324 = vmatpush1.msra.mxu0 0.0
        %325 = vmatprep.subr.mxu0 0.0
        %326 = vmatpush1.msra.mxu0 0.0
        %327 = vmatprep.subr.mxu0 0.0
        %328 = vmatpush1.msra.mxu0 0.0
        %329 = vmatprep.subr.mxu0 0.0
        %330 = vmatpush1.msra.mxu0 0.0
        %331 = vmatprep.subr.mxu0 0.0
        %332 = vmatpush1.msra.mxu0 0.0
        %333 = vmatprep.subr.mxu0 0.0
        %334 = vmatpush1.msra.mxu0 0.0
        %335 = vmatprep.subr.mxu0 0.0
        %336 = vmatpush1.msra.mxu0 0.0
        %337 = vmatprep.subr.mxu0 0.0
        %338 = vmatpush1.msra.mxu0 0.0
        %339 = vmatprep.subr.mxu0 0.0
        %340 = vmatpush1.msra.mxu0 0.0
        %341 = vmatprep.subr.mxu0 0.0
        %342 = vmatpush1.msra.mxu0 0.0
        %343 = vmatprep.mubr.f32.mxu0 0.0
        %344 = vmatmul.mubr.f32.gmra.mrb[0].mxu0 %v277
        %v345 = vpop.f32.mrb[0].mxu0
        %v346 = vadd.f32 %v273, %v345
        %v347 = vpop.f32.mrb[0].mxu0
        %348 = vdwg.mxu0
        %v349 = vmax.f32 %v346, 0.0
        %v350 = vld [vmem:[%s3] sm:$0xff]
        %vm351 = vcmask 64512
        %v353 = vsel %vm351, %v349, 0
        %355 = vmatprep.subr.mxu0 0.0
        %356 = vmatpush1.msra.mxu0 %v350
        %357 = vmatprep.subr.mxu0 0.0
        %358 = vmatpush1.msra.mxu0 0.0
        %359 = vmatprep.subr.mxu0 0.0
        %360 = vmatpush1.msra.mxu0 0.0
        %361 = vmatprep.subr.mxu0 0.0
        %362 = vmatpush1.msra.mxu0 0.0
        %363 = vmatprep.subr.mxu0 0.0
        %364 = vmatpush1.msra.mxu0 0.0
        %365 = vmatprep.subr.mxu0 0.0
        %366 = vmatpush1.msra.mxu0 0.0
        %367 = vmatprep.subr.mxu0 0.0
        %368 = vmatpush1.msra.mxu0 0.0
        %369 = vmatprep.subr.mxu0 0.0
        %370 = vmatpush1.msra.mxu0 0.0
        %371 = vmatprep.subr.mxu0 0.0
        %372 = vmatpush1.msra.mxu0 0.0
        %373 = vmatprep.subr.mxu0 0.0
        %374 = vmatpush1.msra.mxu0 0.0
        %375 = vmatprep.subr.mxu0 0.0
        %376 = vmatpush1.msra.mxu0 0.0
        %377 = vmatprep.subr.mxu0 0.0
        %378 = vmatpush1.msra.mxu0 0.0
        %379 = vmatprep.subr.mxu0 0.0
        %380 = vmatpush1.msra.mxu0 0.0
        %381 = vmatprep.subr.mxu0 0.0
        %382 = vmatpush1.msra.mxu0 0.0
        %383 = vmatprep.subr.mxu0 0.0
        %384 = vmatpush1.msra.mxu0 0.0
        %385 = vmatprep.subr.mxu0 0.0
        %386 = vmatpush1.msra.mxu0 0.0
        %387 = vmatprep.subr.mxu0 0.0
        %388 = vmatpush1.msra.mxu0 0.0
        %389 = vmatprep.subr.mxu0 0.0
        %390 = vmatpush1.msra.mxu0 0.0
        %391 = vmatprep.subr.mxu0 0.0
        %392 = vmatpush1.msra.mxu0 0.0
        %393 = vmatprep.subr.mxu0 0.0
        %394 = vmatpush1.msra.mxu0 0.0
        %395 = vmatprep.subr.mxu0 0.0
        %396 = vmatpush1.msra.mxu0 0.0
        %397 = vmatprep.subr.mxu0 0.0
        %398 = vmatpush1.msra.mxu0 0.0
        %399 = vmatprep.subr.mxu0 0.0
        %400 = vmatpush1.msra.mxu0 0.0
        %401 = vmatprep.subr.mxu0 0.0
        %402 = vmatpush1.msra.mxu0 0.0
        %403 = vmatprep.subr.mxu0 0.0
        %404 = vmatpush1.msra.mxu0 0.0
        %405 = vmatprep.subr.mxu0 0.0
        %406 = vmatpush1.msra.mxu0 0.0
        %407 = vmatprep.subr.mxu0 0.0
        %408 = vmatpush1.msra.mxu0 0.0
        %409 = vmatprep.subr.mxu0 0.0
        %410 = vmatpush1.msra.mxu0 0.0
        %411 = vmatprep.subr.mxu0 0.0
        %412 = vmatpush1.msra.mxu0 0.0
        %413 = vmatprep.subr.mxu0 0.0
        %414 = vmatpush1.msra.mxu0 0.0
        %415 = vmatprep.subr.mxu0 0.0
        %416 = vmatpush1.msra.mxu0 0.0
        %417 = vmatprep.subr.mxu0 0.0
        %418 = vmatpush1.msra.mxu0 0.0
        %419 = vmatprep.mubr.f32.mxu0 0.0
        %420 = vmatmul.mubr.f32.gmra.mrb[0].mxu0 %v353
        %v421 = vpop.f32.mrb[0].mxu0
        %v422 = vadd.f32 0.0, %v421
        %v423 = vpop.f32.mrb[0].mxu0
        %424 = vdwg.mxu0
        %p425 = scmp.eq.s32.totalorder %s25, 0
        // Predicated region
        $region45: #{tpu_custom_call.1} parent=43 // pred_check
          %p426 = pneg %p425
        $region46: #{tpu_custom_call.1} parent=43 // pred_check_branch
          %428 = sbr.rel (%p426) target = $region48
        $region47: #{tpu_custom_call.1} parent=43 // pred_region
          %p429 = scmp.eq.s32.totalorder %s26, 0
          // Predicated region
          $region49: #{tpu_custom_call.1} parent=47 // pred_check
            %p430 = pneg %p429
          $region50: #{tpu_custom_call.1} parent=47 // pred_check_branch
            %432 = sbr.rel (%p430) target = $region52
          $region51: #{tpu_custom_call.1} parent=47 // pred_region
            %vm433 = vcmask 253952
            %434 = vst.msk [vmem:[#allocation2] sm:$0x1] %vm433, 0.0
            %435 = vst.msk [vmem:[#allocation3] sm:$0x1] %vm433, 0.0
          $region52: #{tpu_custom_call.1} parent=47 // pred_fallthru
            _
          %s436 = smul.u32 %s26, 8
          %v437 = vlaneseq
          %v438 = vshrl.u32 %v437, 7
          %v439 = vstv %s436
          %v440 = vadd.s32 %v439, %v438
          %vm441 = vcmp.lt.s32.totalorder %v440, 8
          %v442 = vsel %vm441, 1, 0
          %vm443 = vcmp.eq.s32.totalorder %v442, 1
          %v444 = vsel %vm443, %v422, 0.0
          %v445 = vld [vmem:[#allocation2] sm:$0x1]
          %v446 = vsel %vm275, %v444, 0.0
          %v447 = vrot.slane %v446, 4
          %v448 = vadd.f32 %v446, %v447
          %v449 = vrot.slane %v448, 2
          %v450 = vadd.f32 %v448, %v449
          %v451 = vrot.slane %v450, 1
          %v452 = vadd.f32 %v450, %v451
          %v453 = vadd.f32 %v445, %v452
          %vm454 = vcmask 253952
          %455 = vst.msk [vmem:[#allocation2] sm:$0x1] %vm454, %v453
          %v456 = vld [vmem:[#allocation3] sm:$0x1]
          %v457 = vmul.f32 %v444, %v444
          %v458 = vsel %vm275, %v457, 0.0
          %v459 = vrot.slane %v458, 4
          %v460 = vadd.f32 %v458, %v459
          %v461 = vrot.slane %v460, 2
          %v462 = vadd.f32 %v460, %v461
          %v463 = vrot.slane %v462, 1
          %v464 = vadd.f32 %v462, %v463
          %v465 = vadd.f32 %v456, %v464
          %466 = vst.msk [vmem:[#allocation3] sm:$0x1] %vm454, %v465
        $region48: #{tpu_custom_call.1} parent=43 // pred_fallthru
          _
        %p467 = scmp.eq.s32.totalorder %s25, 1
        // Predicated region
        $region53: #{tpu_custom_call.1} parent=43 // pred_check
          %p468 = pneg %p467
        $region54: #{tpu_custom_call.1} parent=43 // pred_check_branch
          %470 = sbr.rel (%p468) target = $region56
        $region55: #{tpu_custom_call.1} parent=43 // pred_region
          %p471 = scmp.eq.s32.totalorder %s26, 0
          // Predicated region
          $region57: #{tpu_custom_call.1} parent=55 // pred_check
            %p472 = pneg %p471
          $region58: #{tpu_custom_call.1} parent=55 // pred_check_branch
            %474 = sbr.rel (%p472) target = $region60
          $region59: #{tpu_custom_call.1} parent=55 // pred_region
            %v475 = vld [vmem:[#allocation2] sm:$0x1]
            %v476 = vmul.f32 %v475, 0.125
            %v477 = vld [vmem:[#allocation3] sm:$0x1]
            %v478 = vmul.f32 %v477, 0.125
            %v479 = vmul.f32 %v476, %v476
            %v480 = vsub.f32 %v478, %v479
            %v481 = vmax.f32 %v480, 0.0
            %vm482 = vcmask 253952
            %483 = vst.msk [vmem:[#allocation2] sm:$0x1] %vm482, %v476
            %s484 = sld [smem:[#allocation4]]
            %v485 = vadd.f32 %v481, 1e-05
            %v486 = vrsqrt.pop %v485
            %v487 = vstv %s484
            %v488 = vmul.f32 %v487, %v486
            %489 = vst.msk [vmem:[#allocation3] sm:$0x1] %vm482, %v488
          $region60: #{tpu_custom_call.1} parent=55 // pred_fallthru
            _
          %v490 = vld [vmem:[#allocation2] sm:$0x1]
          %v492 = vlaneseq
          %v493 = vshrl.u32 %v492, 7
          %v494 = vsub.s32 0, %v493
          %v495 = vrot.slane %v490, %v494
          %v497 = vsub.f32 %v422, %v495
          %v498 = vld [vmem:[#allocation3] sm:$0x1]
          %v500 = vlaneseq
          %v501 = vshrl.u32 %v500, 7
          %v502 = vsub.s32 0, %v501
          %v503 = vrot.slane %v498, %v502
          %v505 = vmul.f32 %v497, %v503
          %506 = vst.msk [vmem:[%s257] sm:$0xff] %vm275, %v505
        $region56: #{tpu_custom_call.1} parent=43 // pred_fallthru
          _
        %s507 = sand.u32 %s174, 1
        %s508 = scalar_lea.sflag [#allocation6], %s507
        %s509 = sand.u32 %s174, 1
        %s510 = smul.addr %s509, 8
        %s511 = scalar_lea.vmem [#allocation5], %s510
        // Predicated region
        $region61: #{tpu_custom_call.1} parent=43 // pred_check
          %p512 = pneg %p184
        $region62: #{tpu_custom_call.1} parent=43 // pred_check_branch
          %514 = sbr.rel (%p512) target = $region64
        $region63: #{tpu_custom_call.1} parent=43 // pred_region
          %s515 = smul.u32 %s26, %s25
          %s517 = ssub.s32 128, 128
          %518 = vsyncadd %s508, %s517
          %s519 = smul.addr %s515, 128
          %s520 = scalar_lea.hbm %s6, %s519
          %s522 = sshll.u32 %s511, 4
          %s523 = int_to_ptr.vmem [resolvable:$true] %s522
          %525 = dma.vmem_to_hbm [thread:$0]  %s523, 128, %s520, %s508
        $region64: #{tpu_custom_call.1} parent=43 // pred_fallthru
          _
      $region44: #{tpu_custom_call.1} parent=5 // pred_fallthru
        _
      %p526 = scmp.le.s32.totalorder 2, %s16
      // Predicated region
      $region65: #{tpu_custom_call.1} parent=5 // pred_check
        %p527 = pneg %p526
      $region66: #{tpu_custom_call.1} parent=5 // pred_check_branch
        %529 = sbr.rel (%p527) target = $region68
      $region67: #{tpu_custom_call.1} parent=5 // pred_region
        %s530 = ssub.s32 %s16, 2
        // Predicated region
        $region69: #{tpu_custom_call.1} parent=67 // pred_check
          %p531 = pneg %p190
        $region70: #{tpu_custom_call.1} parent=67 // pred_check_branch
          %533 = sbr.rel (%p531) target = $region72
        $region71: #{tpu_custom_call.1} parent=67 // pred_region
          %s534 = sand.u32 %s175, 1
          %s535 = scalar_lea.sflag [#allocation6], %s534
          %s536 = sand.u32 %s175, 1
          %s537 = smul.addr %s536, 8
          %s538 = scalar_lea.vmem [#allocation5], %s537
          %539 = dma.done %s535, 128
        $region72: #{tpu_custom_call.1} parent=67 // pred_fallthru
          _
      $region68: #{tpu_custom_call.1} parent=5 // pred_fallthru
        _
    $region6: #{tpu_custom_call.1} parent=1 // loop_footer
      %s20 = sadd.s32 1, %s16
    $region7: #{tpu_custom_call.1} parent=1 // loop_footer_branch
      %15 = sbr.rel target = $region3
    $region8: #{tpu_custom_call.1} parent=1 // loop_exit
      _
    %540 = vsyncpa [#allocation6], 1
    %s541 = scalar_lea.sflag [#allocation6], 1
    %542 = vsyncpa %s541, 1

</llo_original>
